<compile_context>
chip_gen: v5e
topology: v5e:2x2
jax: 0.10.0
libtpu: 0.0.40
codegen_flags: <defaults>
</compile_context>

<pallas_src>
import jax
import jax.numpy as jnp
from jax.experimental import pallas as pl
from jax.experimental.pallas import tpu as pltpu


def actor_kernel(obs_ref, act_ref,       # VMEM: [tb, F], [tb, A]
                 w1o_ref, w1a_ref,       # VMEM: [F, H], [A, H]  (W1 folded)
                 b1_ref,                 # VMEM: [1, H]
                 w2_ref, b2_ref,         # VMEM: [H, H], [1, H]
                 w3_ref, b3_ref,         # VMEM: [H, A], [1, A]
                 mask_ref,               # VMEM: [1, A]
                 mu_ref):                # out VMEM: [tb, A]
    # Layer 1 (folded): obs @ W1_obs + action @ W1_act_folded + b1, then ReLU.
    x = (jnp.dot(obs_ref[...], w1o_ref[...], preferred_element_type=jnp.float32)
         + jnp.dot(act_ref[...], w1a_ref[...], preferred_element_type=jnp.float32)
         + b1_ref[...])
    x = jnp.maximum(x, 0.0)
    # Layer 2 + ReLU.
    x = jnp.dot(x, w2_ref[...], preferred_element_type=jnp.float32) + b2_ref[...]
    x = jnp.maximum(x, 0.0)
    # Layer 3 -> tanh -> mask (mask broadcasts over batch rows).
    mu = jnp.dot(x, w3_ref[...], preferred_element_type=jnp.float32) + b3_ref[...]
    mu_ref[...] = (jnp.tanh(mu) * mask_ref[...]).astype(mu_ref.dtype)


def fold_first_layer(w1, feature_dim, action_dim):
    """h = [obs, tile(action, 100)]  =>  h @ W1 == obs @ W1[:F] + action @ sum(blocks of W1[F:])."""
    w1_obs = w1[:feature_dim]
    w1_act = w1[feature_dim:].reshape(100, action_dim, w1.shape[1]).sum(axis=0)
    return w1_obs, w1_act


def actor_forward(obs, action, std_scalar, params, offset_mask, *, block_b=128):
    """Returns (mu, std) — the parameters of the TruncatedNormal the PyTorch module builds."""
    w1, b1, w2, b2, w3, b3 = params
    B, feature_dim = obs.shape
    action_dim = action.shape[1]
    hidden_dim = w1.shape[1]

    w1_obs, w1_act = fold_first_layer(w1, feature_dim, action_dim)
    mask2d = offset_mask.reshape(1, action_dim).astype(jnp.float32)

    # Batch tiling: single full-array block if B is small, otherwise 128-row
    # blocks (multiple of 8 sublanes) with zero-padding to a whole grid.
    if B <= block_b:
        tb, Bp = B, B
    else:
        tb = block_b
        Bp = ((B + tb - 1) // tb) * tb
    if Bp != B:
        pad = Bp - B
        obs = jnp.pad(obs, ((0, pad), (0, 0)))
        action = jnp.pad(action, ((0, pad), (0, 0)))
    nb = Bp // tb

    def row_spec(shape):          # tiled along batch
        return pl.BlockSpec(shape, lambda i: (i, 0))

    def resident_spec(shape):     # same block every grid step -> stays in VMEM
        return pl.BlockSpec(shape, lambda i: (0, 0))

    mu = pl.pallas_call(
        actor_kernel,
        out_shape=jax.ShapeDtypeStruct((Bp, action_dim), jnp.float32),
        grid=(nb,),
        in_specs=[
            row_spec((tb, feature_dim)),
            row_spec((tb, action_dim)),
            resident_spec((feature_dim, hidden_dim)),
            resident_spec((action_dim, hidden_dim)),
            resident_spec((1, hidden_dim)),
            resident_spec((hidden_dim, hidden_dim)),
            resident_spec((1, hidden_dim)),
            resident_spec((hidden_dim, action_dim)),
            resident_spec((1, action_dim)),
            resident_spec((1, action_dim)),
        ],
        out_specs=row_spec((tb, action_dim)),
        compiler_params=pltpu.CompilerParams(
            dimension_semantics=("parallel",)),
    )(obs, action, w1_obs, w1_act, b1, w2, b2, w3, b3, mask2d)

    mu = mu[:B]
    # std is batch-independent -> computed once outside the kernel.
    std = jnp.broadcast_to(
        (jnp.float32(std_scalar) * offset_mask.astype(jnp.float32))[None, :],
        (B, action_dim))

    # TODO(synk): utils.TruncatedNormal distribution object (sampling / log_prob)
    # has no Pallas equivalent; we return its parameters (mu, std).
    return mu, std


def init_params(key, feature_dim, action_dim, hidden_dim):
    """Deterministic synthetic init. Weights stored as [in, out] (pre-transposed)."""
    in_dim = feature_dim + action_dim * 100
    k1, k2, k3 = jax.random.split(key, 3)
    scale = 0.05
    w1 = scale * jax.random.normal(k1, (in_dim, hidden_dim), jnp.float32)
    b1 = jnp.zeros((1, hidden_dim), jnp.float32)
    w2 = scale * jax.random.normal(k2, (hidden_dim, hidden_dim), jnp.float32)
    b2 = jnp.zeros((1, hidden_dim), jnp.float32)
    w3 = scale * jax.random.normal(k3, (hidden_dim, action_dim), jnp.float32)
    b3 = jnp.zeros((1, action_dim), jnp.float32)
    return (w1, b1, w2, b2, w3, b3)


if __name__ == "__main__":
    # Small shapes implied by the forward pass.
    B = 2
    feature_dim = 32
    action_dim = 2          # action_shape[0]
    hidden_dim = 64
    std_scalar = 0.1

    key = jax.random.PRNGKey(0)
    k_obs, k_act, k_par = jax.random.split(key, 3)

    obs = jax.random.normal(k_obs, (B, feature_dim), jnp.float32)
    action = jax.random.normal(k_act, (B, action_dim), jnp.float32)
    offset_mask = jnp.array([1.0, 0.0], dtype=jnp.float32)   # mask of length action_dim

    params = init_params(k_par, feature_dim, action_dim, hidden_dim)

    mu, std = actor_forward(obs, action, std_scalar, params, offset_mask)
    jax.block_until_ready((mu, std))

    # Pure-JAX reference using the ORIGINAL (un-folded) semantics.
    w1, b1, w2, b2, w3, b3 = params
    h_ref = jnp.concatenate([obs, jnp.tile(action, (1, 100))], axis=1)
    x = jnp.maximum(h_ref @ w1 + b1, 0.0)
    x = jnp.maximum(x @ w2 + b2, 0.0)
    mu_ref = jnp.tanh(x @ w3 + b3) * offset_mask[None, :]
    std_ref = jnp.ones_like(mu_ref) * std_scalar * offset_mask[None, :]

    # W1 folding changes f32 summation order slightly -> allow ~1e-4.
    assert jnp.allclose(mu, mu_ref, atol=1e-4), "mu mismatch"
    assert jnp.allclose(std, std_ref, atol=1e-6), "std mismatch"
    print("KERNEL_OK")
</pallas_src>

<mosaic_0001>
module attributes {stable_mosaic.version = 11 : i64} {
  func.func @actor_kernel(%arg0: i32, %arg1: memref<2x32xf32, #tpu.memory_space<vmem>>, %arg2: memref<2x2xf32, #tpu.memory_space<vmem>>, %arg3: memref<32x64xf32, #tpu.memory_space<vmem>>, %arg4: memref<2x64xf32, #tpu.memory_space<vmem>>, %arg5: memref<1x64xf32, #tpu.memory_space<vmem>>, %arg6: memref<64x64xf32, #tpu.memory_space<vmem>>, %arg7: memref<1x64xf32, #tpu.memory_space<vmem>>, %arg8: memref<64x2xf32, #tpu.memory_space<vmem>>, %arg9: memref<1x2xf32, #tpu.memory_space<vmem>>, %arg10: memref<1x2xf32, #tpu.memory_space<vmem>>, %arg11: memref<2x2xf32, #tpu.memory_space<vmem>>) attributes {dimension_semantics = [#tpu.dimension_semantics<parallel>], iteration_bounds = array<i64: 1>, scalar_prefetch = 0 : i64, scratch_operands = 0 : i64, tpu.core_type = #tpu.core_type<tc>, window_params = [{transform_indices = @transform_0, window_bounds = array<i64: 2, 32>}, {transform_indices = @transform_1, window_bounds = array<i64: 2, 2>}, {pipeline_mode = #tpu.pipeline_mode<synchronous>, transform_indices = @transform_2, window_bounds = array<i64: 32, 64>}, {pipeline_mode = #tpu.pipeline_mode<synchronous>, transform_indices = @transform_3, window_bounds = array<i64: 2, 64>}, {pipeline_mode = #tpu.pipeline_mode<synchronous>, transform_indices = @transform_4, window_bounds = array<i64: 1, 64>}, {pipeline_mode = #tpu.pipeline_mode<synchronous>, transform_indices = @transform_5, window_bounds = array<i64: 64, 64>}, {pipeline_mode = #tpu.pipeline_mode<synchronous>, transform_indices = @transform_6, window_bounds = array<i64: 1, 64>}, {pipeline_mode = #tpu.pipeline_mode<synchronous>, transform_indices = @transform_7, window_bounds = array<i64: 64, 2>}, {pipeline_mode = #tpu.pipeline_mode<synchronous>, transform_indices = @transform_8, window_bounds = array<i64: 1, 2>}, {pipeline_mode = #tpu.pipeline_mode<synchronous>, transform_indices = @transform_9, window_bounds = array<i64: 1, 2>}, {transform_indices = @transform_10, window_bounds = array<i64: 2, 2>}]} {
    %c0 = arith.constant 0 : index
    %c0_0 = arith.constant 0 : index
    %0 = vector.load %arg1[%c0, %c0_0] : memref<2x32xf32, #tpu.memory_space<vmem>>, vector<2x32xf32>
    %c0_1 = arith.constant 0 : index
    %c0_2 = arith.constant 0 : index
    %1 = vector.load %arg3[%c0_1, %c0_2] : memref<32x64xf32, #tpu.memory_space<vmem>>, vector<32x64xf32>
    %cst = arith.constant dense<0.000000e+00> : vector<2x64xf32>
    %2 = tpu.matmul %0, %1, %cst {dimension_numbers = #tpu.dot_dimension_numbers<[1], [0], [0], [1], [0, 0, 1, 1], [], []>} : vector<2x32xf32>, vector<32x64xf32>, vector<2x64xf32> -> vector<2x64xf32>
    %c0_3 = arith.constant 0 : index
    %c0_4 = arith.constant 0 : index
    %3 = vector.load %arg2[%c0_3, %c0_4] : memref<2x2xf32, #tpu.memory_space<vmem>>, vector<2x2xf32>
    %c0_5 = arith.constant 0 : index
    %c0_6 = arith.constant 0 : index
    %4 = vector.load %arg4[%c0_5, %c0_6] : memref<2x64xf32, #tpu.memory_space<vmem>>, vector<2x64xf32>
    %cst_7 = arith.constant dense<0.000000e+00> : vector<2x64xf32>
    %5 = tpu.matmul %3, %4, %cst_7 {dimension_numbers = #tpu.dot_dimension_numbers<[1], [0], [0], [1], [0, 0, 1, 1], [], []>} : vector<2x2xf32>, vector<2x64xf32>, vector<2x64xf32> -> vector<2x64xf32>
    %6 = arith.addf %2, %5 : vector<2x64xf32>
    %c0_8 = arith.constant 0 : index
    %c0_9 = arith.constant 0 : index
    %7 = vector.load %arg5[%c0_8, %c0_9] : memref<1x64xf32, #tpu.memory_space<vmem>>, vector<1x64xf32>
    %8 = vector.broadcast %7 : vector<1x64xf32> to vector<2x64xf32>
    %9 = arith.addf %6, %8 : vector<2x64xf32>
    %cst_10 = arith.constant 0.000000e+00 : f32
    %10 = vector.broadcast %cst_10 : f32 to vector<2x64xf32>
    %11 = arith.maximumf %9, %10 : vector<2x64xf32>
    %c0_11 = arith.constant 0 : index
    %c0_12 = arith.constant 0 : index
    %12 = vector.load %arg6[%c0_11, %c0_12] : memref<64x64xf32, #tpu.memory_space<vmem>>, vector<64x64xf32>
    %cst_13 = arith.constant dense<0.000000e+00> : vector<2x64xf32>
    %13 = tpu.matmul %11, %12, %cst_13 {dimension_numbers = #tpu.dot_dimension_numbers<[1], [0], [0], [1], [0, 0, 1, 1], [], []>} : vector<2x64xf32>, vector<64x64xf32>, vector<2x64xf32> -> vector<2x64xf32>
    %c0_14 = arith.constant 0 : index
    %c0_15 = arith.constant 0 : index
    %14 = vector.load %arg7[%c0_14, %c0_15] : memref<1x64xf32, #tpu.memory_space<vmem>>, vector<1x64xf32>
    %15 = vector.broadcast %14 : vector<1x64xf32> to vector<2x64xf32>
    %16 = arith.addf %13, %15 : vector<2x64xf32>
    %cst_16 = arith.constant 0.000000e+00 : f32
    %17 = vector.broadcast %cst_16 : f32 to vector<2x64xf32>
    %18 = arith.maximumf %16, %17 : vector<2x64xf32>
    %c0_17 = arith.constant 0 : index
    %c0_18 = arith.constant 0 : index
    %19 = vector.load %arg8[%c0_17, %c0_18] : memref<64x2xf32, #tpu.memory_space<vmem>>, vector<64x2xf32>
    %cst_19 = arith.constant dense<0.000000e+00> : vector<2x2xf32>
    %20 = tpu.matmul %18, %19, %cst_19 {dimension_numbers = #tpu.dot_dimension_numbers<[1], [0], [0], [1], [0, 0, 1, 1], [], []>} : vector<2x64xf32>, vector<64x2xf32>, vector<2x2xf32> -> vector<2x2xf32>
    %c0_20 = arith.constant 0 : index
    %c0_21 = arith.constant 0 : index
    %21 = vector.load %arg9[%c0_20, %c0_21] : memref<1x2xf32, #tpu.memory_space<vmem>>, vector<1x2xf32>
    %22 = vector.broadcast %21 : vector<1x2xf32> to vector<2x2xf32>
    %23 = arith.addf %20, %22 : vector<2x2xf32>
    %24 = math.tanh %23 : vector<2x2xf32>
    %c0_22 = arith.constant 0 : index
    %c0_23 = arith.constant 0 : index
    %25 = vector.load %arg10[%c0_22, %c0_23] : memref<1x2xf32, #tpu.memory_space<vmem>>, vector<1x2xf32>
    %26 = vector.broadcast %25 : vector<1x2xf32> to vector<2x2xf32>
    %27 = arith.mulf %24, %26 : vector<2x2xf32>
    %c0_24 = arith.constant 0 : index
    %c0_25 = arith.constant 0 : index
    %28 = vector.load %arg11[%c0_24, %c0_25] : memref<2x2xf32, #tpu.memory_space<vmem>>, vector<2x2xf32>
    tpu.vector_store %arg11[%c0_24, %c0_25], %27 {strides = array<i32>} : memref<2x2xf32, #tpu.memory_space<vmem>>, vector<2x2xf32>,
    return
  }
  func.func @transform_0(%arg0: i32) -> (i32, i32) {
    %c0_i32 = arith.constant 0 : i32
    %c0_i32_0 = arith.constant 0 : i32
    return %arg0, %c0_i32 : i32, i32
  }
  func.func @transform_1(%arg0: i32) -> (i32, i32) {
    %c0_i32 = arith.constant 0 : i32
    %c0_i32_0 = arith.constant 0 : i32
    return %arg0, %c0_i32 : i32, i32
  }
  func.func @transform_2(%arg0: i32) -> (i32, i32) {
    %c0_i32 = arith.constant 0 : i32
    %c0_i32_0 = arith.constant 0 : i32
    %c0_i32_1 = arith.constant 0 : i32
    return %c0_i32, %c0_i32_0 : i32, i32
  }
  func.func @transform_3(%arg0: i32) -> (i32, i32) {
    %c0_i32 = arith.constant 0 : i32
    %c0_i32_0 = arith.constant 0 : i32
    %c0_i32_1 = arith.constant 0 : i32
    return %c0_i32, %c0_i32_0 : i32, i32
  }
  func.func @transform_4(%arg0: i32) -> (i32, i32) {
    %c0_i32 = arith.constant 0 : i32
    %c0_i32_0 = arith.constant 0 : i32
    %c0_i32_1 = arith.constant 0 : i32
    return %c0_i32, %c0_i32_0 : i32, i32
  }
  func.func @transform_5(%arg0: i32) -> (i32, i32) {
    %c0_i32 = arith.constant 0 : i32
    %c0_i32_0 = arith.constant 0 : i32
    %c0_i32_1 = arith.constant 0 : i32
    return %c0_i32, %c0_i32_0 : i32, i32
  }
  func.func @transform_6(%arg0: i32) -> (i32, i32) {
    %c0_i32 = arith.constant 0 : i32
    %c0_i32_0 = arith.constant 0 : i32
    %c0_i32_1 = arith.constant 0 : i32
    return %c0_i32, %c0_i32_0 : i32, i32
  }
  func.func @transform_7(%arg0: i32) -> (i32, i32) {
    %c0_i32 = arith.constant 0 : i32
    %c0_i32_0 = arith.constant 0 : i32
    %c0_i32_1 = arith.constant 0 : i32
    return %c0_i32, %c0_i32_0 : i32, i32
  }
  func.func @transform_8(%arg0: i32) -> (i32, i32) {
    %c0_i32 = arith.constant 0 : i32
    %c0_i32_0 = arith.constant 0 : i32
    %c0_i32_1 = arith.constant 0 : i32
    return %c0_i32, %c0_i32_0 : i32, i32
  }
  func.func @transform_9(%arg0: i32) -> (i32, i32) {
    %c0_i32 = arith.constant 0 : i32
    %c0_i32_0 = arith.constant 0 : i32
    %c0_i32_1 = arith.constant 0 : i32
    return %c0_i32, %c0_i32_0 : i32, i32
  }
  func.func @transform_10(%arg0: i32) -> (i32, i32) {
    %c0_i32 = arith.constant 0 : i32
    %c0_i32_0 = arith.constant 0 : i32
    return %arg0, %c0_i32 : i32, i32
  }
}

</mosaic_0001>

<llo_original>
// kernel: tpu_custom_call.1
$region0: #{tpu_custom_call.1}
  #allocation0 [shape = 'u32[]', space=smem, size = 0x4, offset = 0x4, fixed_abs, tag = 'smem constant byte address 0x4 - core index']
  #allocation1 [shape = 'u32[72,128]{1,0:T(1,128)}', space=vmem, size = 0x9000, scoped, tag = 'internal scratch']
  %s0 = inlined_call_operand.vmem [shape: f32[2,32], index: 0, kind: input, shape index: {}]
  %s1 = inlined_call_operand.hbm [shape: f32[2,2], index: 1, kind: input, shape index: {}]
  %s2 = inlined_call_operand.hbm [shape: f32[32,64], index: 2, kind: input, shape index: {}]
  %s3 = inlined_call_operand.hbm [shape: f32[2,64], index: 3, kind: input, shape index: {}]
  %s4 = inlined_call_operand.vmem [shape: f32[1,64], index: 4, kind: input, shape index: {}]
  %s5 = inlined_call_operand.vmem [shape: f32[64,64], index: 5, kind: input, shape index: {}]
  %s6 = inlined_call_operand.vmem [shape: f32[1,64], index: 6, kind: input, shape index: {}]
  %s7 = inlined_call_operand.vmem [shape: f32[64,2], index: 7, kind: input, shape index: {}]
  %s8 = inlined_call_operand.vmem [shape: f32[1,2], index: 8, kind: input, shape index: {}]
  %s9 = inlined_call_operand.vmem [shape: f32[1,2], index: 9, kind: input, shape index: {}]
  %s10 = inlined_call_operand.hbm [shape: f32[2,2], index: 10, kind: output, shape index: {}]
  %s11 = sld [smem:[#allocation0]]
  $region62: #{tpu_custom_call.1} parent=0
    _
  %s13 = ssub.s32 1, %s11
  %s14 = scalar_select 0, %s13, %s11
  $region1: #{tpu_custom_call.1} parent=0
    #allocation2 [shape = 'u8[1024]{0}', space=vmem, size = 0x400, scoped, tag = 'input window, operand 1, single buffered']
    #allocation3 [shape = 's32[1]{0}', space=sflag, size = 0x4, scoped, tag = 'scoped memory for tpu_custom_call.1']
    #allocation4 [shape = 's32[1]{0}', space=sflag, size = 0x4, scoped, tag = 'scoped memory for tpu_custom_call.1']
    #allocation5 [shape = 'u8[16384]{0}', space=vmem, size = 0x4000, scoped, tag = 'input window, operand 2, single buffered']
    #allocation6 [shape = 's32[1]{0}', space=sflag, size = 0x4, scoped, tag = 'scoped memory for tpu_custom_call.1']
    #allocation7 [shape = 'u8[1024]{0}', space=vmem, size = 0x400, scoped, tag = 'input window, operand 3, single buffered']
    #allocation8 [shape = 'u8[1024]{0}', space=vmem, size = 0x400, scoped, tag = 'output window, operand 0, single buffered']
    %15 = vsyncpa [#allocation3], 0
    %16 = vsyncpa [#allocation6], 0
    %17 = vsyncpa [#allocation4], 0
    // Predicated region
    $region2: #{tpu_custom_call.1} parent=1 // pred_check
      _
    $region3: #{tpu_custom_call.1} parent=1 // pred_check_branch
      %19 = sbr.rel (0) target = $region5
    $region4: #{tpu_custom_call.1} parent=1 // pred_region
      _
    $region5: #{tpu_custom_call.1} parent=1 // pred_fallthru
      _
    // Predicated region
    $region6: #{tpu_custom_call.1} parent=1 // pred_check
      _
    $region7: #{tpu_custom_call.1} parent=1 // pred_check_branch
      %21 = sbr.rel (0) target = $region9
    $region8: #{tpu_custom_call.1} parent=1 // pred_region
      %23 = vsyncadd [#allocation3], 0
      %s25 = sshll.u32 %s1, 4
      %s26 = int_to_ptr.hbm [resolvable:$true] %s25
      %s27 = sshll.u32 [#allocation2], 4
      %s28 = int_to_ptr.vmem [resolvable:$true] %s27
      %30 = dma.hbm_to_vmem [thread:$0]  %s26, 32, %s28, [#allocation3]
    $region9: #{tpu_custom_call.1} parent=1 // pred_fallthru
      _
    // Predicated region
    $region10: #{tpu_custom_call.1} parent=1 // pred_check
      _
    $region11: #{tpu_custom_call.1} parent=1 // pred_check_branch
      %32 = sbr.rel (0) target = $region13
    $region12: #{tpu_custom_call.1} parent=1 // pred_region
      %34 = vsyncadd [#allocation6], 0
      %s35 = sshll.u32 %s2, 4
      %s36 = int_to_ptr.hbm [resolvable:$true] %s35
      %s37 = sshll.u32 [#allocation5], 4
      %s38 = int_to_ptr.vmem [resolvable:$true] %s37
      %43 = dma.hbm_to_vmem [thread:$0]  %s36, 512, %s38, [#allocation6], 128, 128, 8
    $region13: #{tpu_custom_call.1} parent=1 // pred_fallthru
      _
    // Predicated region
    $region14: #{tpu_custom_call.1} parent=1 // pred_check
      _
    $region15: #{tpu_custom_call.1} parent=1 // pred_check_branch
      %45 = sbr.rel (0) target = $region17
    $region16: #{tpu_custom_call.1} parent=1 // pred_region
      %47 = vsyncadd [#allocation6], 0
      %s49 = sshll.u32 %s3, 4
      %s50 = int_to_ptr.hbm [resolvable:$true] %s49
      %s51 = sshll.u32 [#allocation7], 4
      %s52 = int_to_ptr.vmem [resolvable:$true] %s51
      %54 = dma.hbm_to_vmem [thread:$0]  %s50, 32, %s52, [#allocation6]
    $region17: #{tpu_custom_call.1} parent=1 // pred_fallthru
      _
    // Predicated region
    $region18: #{tpu_custom_call.1} parent=1 // pred_check
      _
    $region19: #{tpu_custom_call.1} parent=1 // pred_check_branch
      %56 = sbr.rel (0) target = $region21
    $region20: #{tpu_custom_call.1} parent=1 // pred_region
      _
    $region21: #{tpu_custom_call.1} parent=1 // pred_fallthru
      _
    // Predicated region
    $region22: #{tpu_custom_call.1} parent=1 // pred_check
      _
    $region23: #{tpu_custom_call.1} parent=1 // pred_check_branch
      %58 = sbr.rel (0) target = $region25
    $region24: #{tpu_custom_call.1} parent=1 // pred_region
      _
    $region25: #{tpu_custom_call.1} parent=1 // pred_fallthru
      _
    // Predicated region
    $region26: #{tpu_custom_call.1} parent=1 // pred_check
      _
    $region27: #{tpu_custom_call.1} parent=1 // pred_check_branch
      %60 = sbr.rel (0) target = $region29
    $region28: #{tpu_custom_call.1} parent=1 // pred_region
      _
    $region29: #{tpu_custom_call.1} parent=1 // pred_fallthru
      _
    // Predicated region
    $region30: #{tpu_custom_call.1} parent=1 // pred_check
      _
    $region31: #{tpu_custom_call.1} parent=1 // pred_check_branch
      %62 = sbr.rel (0) target = $region33
    $region32: #{tpu_custom_call.1} parent=1 // pred_region
      _
    $region33: #{tpu_custom_call.1} parent=1 // pred_fallthru
      _
    // Predicated region
    $region34: #{tpu_custom_call.1} parent=1 // pred_check
      _
    $region35: #{tpu_custom_call.1} parent=1 // pred_check_branch
      %64 = sbr.rel (0) target = $region37
    $region36: #{tpu_custom_call.1} parent=1 // pred_region
      _
    $region37: #{tpu_custom_call.1} parent=1 // pred_fallthru
      _
    // Predicated region
    $region38: #{tpu_custom_call.1} parent=1 // pred_check
      _
    $region39: #{tpu_custom_call.1} parent=1 // pred_check_branch
      %66 = sbr.rel (0) target = $region41
    $region40: #{tpu_custom_call.1} parent=1 // pred_region
      _
    $region41: #{tpu_custom_call.1} parent=1 // pred_fallthru
      _
    // Predicated region
    $region42: #{tpu_custom_call.1} parent=1 // pred_check
      _
    $region43: #{tpu_custom_call.1} parent=1 // pred_check_branch
      %68 = sbr.rel (0) target = $region45
    $region44: #{tpu_custom_call.1} parent=1 // pred_region
      %70 = dma.done [#allocation3], 32
    $region45: #{tpu_custom_call.1} parent=1 // pred_fallthru
      _
    // Predicated region
    $region46: #{tpu_custom_call.1} parent=1 // pred_check
      _
    $region47: #{tpu_custom_call.1} parent=1 // pred_check_branch
      %72 = sbr.rel (0) target = $region49
    $region48: #{tpu_custom_call.1} parent=1 // pred_region
      %74 = dma.done [#allocation6], 512
    $region49: #{tpu_custom_call.1} parent=1 // pred_fallthru
      _
    // Predicated region
    $region50: #{tpu_custom_call.1} parent=1 // pred_check
      _
    $region51: #{tpu_custom_call.1} parent=1 // pred_check_branch
      %76 = sbr.rel (0) target = $region53
    $region52: #{tpu_custom_call.1} parent=1 // pred_region
      %78 = dma.done [#allocation6], 32
    $region53: #{tpu_custom_call.1} parent=1 // pred_fallthru
      _
    %v79 = vld [vmem:[%s0] sm:$0x3]
    %v80 = vld [vmem:[#allocation5] sm:$0xff]
    %v81 = vld [vmem:[#allocation5 + $0x8] sm:$0xff]
    %v82 = vld [vmem:[#allocation5 + $0x10] sm:$0xff]
    %v83 = vld [vmem:[#allocation5 + $0x18] sm:$0xff]
    %v84 = vld [vmem:[#allocation2] sm:$0x3]
    %v85 = vld [vmem:[#allocation7] sm:$0x3]
    %vm86 = vcmask 15360
    %v88 = vsel %vm86, %v84, 0
    %vm90 = vcmask 1041408
    %v92 = vsel %vm90, %v85, 0
    %94 = vmatpush.msra.mxu0 0.0
    %95 = vmatpush.msra.mxu0 0.0
    %96 = vmatpush.msra.mxu0 0.0
    %97 = vmatpush.msra.mxu0 0.0
    %98 = vmatpush.msra.mxu0 0.0
    %99 = vmatpush.msra.mxu0 0.0
    %100 = vmatpush.msra.mxu0 0.0
    %101 = vmatpush.msra.mxu0 0.0
    %102 = vmatpush.msra.mxu0 0.0
    %103 = vmatpush.msra.mxu0 0.0
    %104 = vmatpush.msra.mxu0 0.0
    %105 = vmatpush.msra.mxu0 0.0
    %106 = vmatpush.msra.mxu0 0.0
    %107 = vmatpush.msra.mxu0 0.0
    %108 = vmatpush.msra.mxu0 0.0
    %109 = vmatpush.msra.mxu0 %v92
    %110 = vmatmul.f32.gmra.mxu0 %v88
    %v111 = vpop.f32.mrf.mxu0
    %v112 = vadd.f32 0.0, %v111
    %113 = vdwg.mxu0
    %vm114 = vcmask 261120
    %v116 = vsel %vm114, %v79, 0
    %118 = vmatpush.msra.mxu0 0.0
    %119 = vmatpush.msra.mxu0 0.0
    %120 = vmatpush.msra.mxu0 0.0
    %121 = vmatpush.msra.mxu0 0.0
    %122 = vmatpush.msra.mxu0 0.0
    %123 = vmatpush.msra.mxu0 0.0
    %124 = vmatpush.msra.mxu0 0.0
    %125 = vmatpush.msra.mxu0 0.0
    %126 = vmatpush.msra.mxu0 0.0
    %127 = vmatpush.msra.mxu0 0.0
    %128 = vmatpush.msra.mxu0 0.0
    %129 = vmatpush.msra.mxu0 0.0
    %130 = vmatpush.msra.mxu0 %v83
    %131 = vmatpush.msra.mxu0 %v82
    %132 = vmatpush.msra.mxu0 %v81
    %133 = vmatpush.msra.mxu0 %v80
    %134 = vmatmul.f32.gmra.mxu0 %v116
    %v135 = vpop.f32.mrf.mxu0
    %v136 = vadd.f32 %v112, %v135
    %137 = vdwg.mxu0
    %v138 = vld [vmem:[%s4] sm:$0x1]
    %v140 = vperm.slane %v138, 0
    %v142 = vadd.f32 %v136, %v140
    %v143 = vmax.f32 %v142, 0.0
    %v144 = vld [vmem:[%s5] sm:$0xff]
    %v145 = vld [vmem:[%s5 + $0x8] sm:$0xff]
    %v146 = vld [vmem:[%s5 + $0x10] sm:$0xff]
    %v147 = vld [vmem:[%s5 + $0x18] sm:$0xff]
    %v148 = vld [vmem:[%s5 + $0x20] sm:$0xff]
    %v149 = vld [vmem:[%s5 + $0x28] sm:$0xff]
    %v150 = vld [vmem:[%s5 + $0x30] sm:$0xff]
    %v151 = vld [vmem:[%s5 + $0x38] sm:$0xff]
    %v152 = vld [vmem:[%s6] sm:$0x1]
    %v154 = vperm.slane %v152, 0
    %vm156 = vcmask 523264
    %v158 = vsel %vm156, %v143, 0
    %160 = vmatpush.msra.mxu0 0.0
    %161 = vmatpush.msra.mxu0 0.0
    %162 = vmatpush.msra.mxu0 0.0
    %163 = vmatpush.msra.mxu0 0.0
    %164 = vmatpush.msra.mxu0 0.0
    %165 = vmatpush.msra.mxu0 0.0
    %166 = vmatpush.msra.mxu0 0.0
    %167 = vmatpush.msra.mxu0 0.0
    %168 = vmatpush.msra.mxu0 %v151
    %169 = vmatpush.msra.mxu0 %v150
    %170 = vmatpush.msra.mxu0 %v149
    %171 = vmatpush.msra.mxu0 %v148
    %172 = vmatpush.msra.mxu0 %v147
    %173 = vmatpush.msra.mxu0 %v146
    %174 = vmatpush.msra.mxu0 %v145
    %175 = vmatpush.msra.mxu0 %v144
    %176 = vmatmul.f32.gmra.mxu0 %v158
    %v177 = vpop.f32.mrf.mxu0
    %v178 = vadd.f32 %v154, %v177
    %179 = vdwg.mxu0
    %v180 = vmax.f32 %v178, 0.0
    %v181 = vld [vmem:[%s7] sm:$0xff]
    %v182 = vld [vmem:[%s7 + $0x8] sm:$0xff]
    %v183 = vld [vmem:[%s7 + $0x10] sm:$0xff]
    %v184 = vld [vmem:[%s7 + $0x18] sm:$0xff]
    %v185 = vld [vmem:[%s7 + $0x20] sm:$0xff]
    %v186 = vld [vmem:[%s7 + $0x28] sm:$0xff]
    %v187 = vld [vmem:[%s7 + $0x30] sm:$0xff]
    %v188 = vld [vmem:[%s7 + $0x38] sm:$0xff]
    %v189 = vld [vmem:[%s8] sm:$0x1]
    %v191 = vperm.slane %v189, 0
    %v194 = vsel %vm156, %v180, 0
    %196 = vmatpush.msra.mxu0 0.0
    %197 = vmatpush.msra.mxu0 0.0
    %198 = vmatpush.msra.mxu0 0.0
    %199 = vmatpush.msra.mxu0 0.0
    %200 = vmatpush.msra.mxu0 0.0
    %201 = vmatpush.msra.mxu0 0.0
    %202 = vmatpush.msra.mxu0 0.0
    %203 = vmatpush.msra.mxu0 0.0
    %204 = vmatpush.msra.mxu0 %v188
    %205 = vmatpush.msra.mxu0 %v187
    %206 = vmatpush.msra.mxu0 %v186
    %207 = vmatpush.msra.mxu0 %v185
    %208 = vmatpush.msra.mxu0 %v184
    %209 = vmatpush.msra.mxu0 %v183
    %210 = vmatpush.msra.mxu0 %v182
    %211 = vmatpush.msra.mxu0 %v181
    %212 = vmatmul.f32.gmra.mxu0 %v194
    %v213 = vpop.f32.mrf.mxu0
    %v214 = vadd.f32 %v191, %v213
    %215 = vdwg.mxu0
    %v216 = vtanh.pop %v214
    %v217 = vld [vmem:[%s9] sm:$0x1]
    %v219 = vperm.slane %v217, 0
    %v221 = vmul.f32 %v216, %v219
    %vm222 = vcmask 9216
    %223 = vst.msk [vmem:[#allocation8] sm:$0x3] %vm222, %v221
    // Predicated region
    $region54: #{tpu_custom_call.1} parent=1 // pred_check
      _
    $region55: #{tpu_custom_call.1} parent=1 // pred_check_branch
      %225 = sbr.rel (0) target = $region57
    $region56: #{tpu_custom_call.1} parent=1 // pred_region
      %227 = vsyncadd [#allocation4], 0
      %s229 = sshll.u32 [#allocation8], 4
      %s230 = int_to_ptr.vmem [resolvable:$true] %s229
      %s231 = sshll.u32 %s10, 4
      %s232 = int_to_ptr.hbm [resolvable:$true] %s231
      %234 = dma.vmem_to_hbm [thread:$0]  %s230, 32, %s232, [#allocation4]
    $region57: #{tpu_custom_call.1} parent=1 // pred_fallthru
      _
    // Predicated region
    $region58: #{tpu_custom_call.1} parent=1 // pred_check
      _
    $region59: #{tpu_custom_call.1} parent=1 // pred_check_branch
      %236 = sbr.rel (0) target = $region61
    $region60: #{tpu_custom_call.1} parent=1 // pred_region
      %238 = dma.done [#allocation4], 32
    $region61: #{tpu_custom_call.1} parent=1 // pred_fallthru
      _
    %239 = vsyncpa [#allocation3], 1
    %240 = vsyncpa [#allocation6], 1
    %241 = vsyncpa [#allocation4], 1

</llo_original>
